<compile_context>
chip_gen: v6e
topology: v6e:2x2x1
jax: 0.10.0
libtpu: 0.0.40
codegen_flags: <defaults>
</compile_context>

<pallas_src>
import functools

import jax
import jax.numpy as jnp
import numpy as np
from jax.experimental import pallas as pl
from jax.experimental.pallas import tpu as pltpu

SELU_ALPHA = 1.6732632423543772
SELU_SCALE = 1.0507009873554805
BN_EPS = 1e-5
LANE = 128


def _round_up(x, m):
    return ((x + m - 1) // m) * m


def _cdiv(a, b):
    return -(-a // b)


def _selu(x):
    """Full SELU (used by the pure-JAX reference)."""
    return SELU_SCALE * jnp.where(
        x > 0, x, SELU_ALPHA * (jnp.exp(jnp.minimum(x, 0.0)) - 1.0))


def _vmem_capacity_bytes():
    """Best-effort physical VMEM query; conservative (v7x = 64 MiB) fallback."""
    try:
        return int(pltpu.get_tpu_info().vmem_capacity_bytes)
    except Exception:
        return 64 << 20


# ---------------------------------------------------------------------------
# Kernel: one batch tile through 5 fused (dot + bias + SELU-noscale) layers
# plus the bn_out per-channel affine.  The SELU 1.0507 scale and all inner BN
# affines are pre-folded into the weights / the packed vec rows.
# ---------------------------------------------------------------------------
def nn1_kernel(x_ref, w_in, w1, w2, w3, w_out, vec_ref, out_ref, *, h_w, o_w):
    def layer(h, w_ref, row, width):
        w = w_ref[...]
        z = jnp.dot(h.astype(w.dtype), w, preferred_element_type=jnp.float32)
        z = z + vec_ref[row:row + 1, 0:width]          # bias (f32, broadcast over rows)
        # SELU with the 1.0507 scale folded out (into the next layer's weights).
        return jnp.where(z > 0.0, z,
                         SELU_ALPHA * (jnp.exp(jnp.minimum(z, 0.0)) - 1.0))

    h = layer(x_ref[...], w_in, 0, h_w)                # '_in'  (bn0, bn01 pre-folded)
    h = layer(h, w1, 1, h_w)                           # '_h1'
    h = layer(h, w2, 2, h_w)                           # '_h2'
    h = layer(h, w3, 3, h_w)                           # '_h3'
    h = layer(h, w_out, 4, o_w)                        # layer_Out + selu-noscale
    out = h * vec_ref[5:6, 0:o_w] + vec_ref[6:7, 0:o_w]   # bn_out affine (scale incl. 1.0507)
    out_ref[...] = out.astype(out_ref.dtype)


# ---------------------------------------------------------------------------
# JAX glue: BN + SELU-scale folding, padding, balanced batch tiling.
# ---------------------------------------------------------------------------
def fold_bn(gamma, beta, mean, var):
    scale = gamma / jnp.sqrt(var + BN_EPS)
    shift = beta - mean * scale
    return scale, shift


def nn1_forward(x, params, *, weight_dtype=jnp.bfloat16, tile_n=None):
    """Eval-mode forward of NN_1 (dropout p=0, outFeed='_h3', useOutBn=True)."""
    N, F = x.shape
    H = params["w1"].shape[1]
    O = params["w_out"].shape[1]

    H_pad = _round_up(H, LANE)
    O_pad = _round_up(O, LANE)
    W = max(H_pad, O_pad)

    # ---- Fold BN affines (and the SELU 1.0507 scale) into the next layer (f32). ----
    s0, t0 = fold_bn(*params["bn0"])
    w_in = s0[:, None] * params["w_in"]
    b_in = t0 @ params["w_in"] + params["b_in"]

    s01, t01 = fold_bn(*params["bn01"])
    w1 = (SELU_SCALE * s01)[:, None] * params["w1"]
    b1 = t01 @ params["w1"] + params["b1"]

    s1, t1 = fold_bn(*params["bn1"])
    w2 = (SELU_SCALE * s1)[:, None] * params["w2"]
    b2 = t1 @ params["w2"] + params["b2"]

    s2, t2 = fold_bn(*params["bn2"])
    w3 = (SELU_SCALE * s2)[:, None] * params["w3"]
    b3 = t2 @ params["w3"] + params["b3"]

    s3, t3 = fold_bn(*params["bn3"])
    w_out = (SELU_SCALE * s3)[:, None] * params["w_out"]
    b_out = t3 @ params["w_out"] + params["b_out"]

    s_out, t_out = fold_bn(*params["bn_out"])
    so = SELU_SCALE * s_out            # SELU scale of the last activation folded in here
    to = t_out

    # ---- Pad output dims to 128 lanes (feature dim of x / w_in stays unpadded). ----
    weights = [
        jnp.pad(w_in, ((0, 0), (0, H_pad - H))).astype(weight_dtype),
        jnp.pad(w1, ((0, H_pad - H), (0, H_pad - H))).astype(weight_dtype),
        jnp.pad(w2, ((0, H_pad - H), (0, H_pad - H))).astype(weight_dtype),
        jnp.pad(w3, ((0, H_pad - H), (0, H_pad - H))).astype(weight_dtype),
        jnp.pad(w_out, ((0, H_pad - H), (0, O_pad - O))).astype(weight_dtype),
    ]

    # Single packed (8, W) f32 array: rows 0-3 = hidden biases, 4 = out bias,
    # 5 = bn_out scale, 6 = bn_out shift, 7 = unused.
    vec = jnp.zeros((8, W), jnp.float32)
    vec = vec.at[0, :H].set(b_in)
    vec = vec.at[1, :H].set(b1)
    vec = vec.at[2, :H].set(b2)
    vec = vec.at[3, :H].set(b3)
    vec = vec.at[4, :O].set(b_out)
    vec = vec.at[5, :O].set(so)
    vec = vec.at[6, :O].set(to)

    # ---- VMEM capacity / default tile size. ----
    vmem_cap = _vmem_capacity_bytes()
    if tile_n is None:
        tile_n = 4096 if vmem_cap >= (100 << 20) else 2048   # v5e/v6e vs v7x

    # ---- Balanced batch tiling; grid >= 2 when there is enough work (v7x 2 TCs). ----
    n_steps = max(1, _cdiv(N, tile_n))
    if n_steps == 1 and N >= 16:
        n_steps = 2
    tile = _round_up(_cdiv(N, n_steps), 8)
    N_pad = n_steps * tile
    x_p = x if N_pad == N else jnp.pad(x, ((0, N_pad - N), (0, 0)))
    grid = (n_steps,)

    def resident(shape):
        return pl.BlockSpec(shape, lambda i: (0,) * len(shape))

    in_specs = [pl.BlockSpec((tile, F), lambda i: (i, 0))]
    args = [x_p]
    for w in weights:
        in_specs.append(resident(w.shape))
        args.append(w)
    in_specs.append(resident(vec.shape))
    args.append(vec)

    out_spec = pl.BlockSpec((tile, O_pad), lambda i: (i, 0))

    # ---- VMEM budget (count default double-buffering of the resident inputs too). ----
    w_itemsize = jnp.dtype(weight_dtype).itemsize
    weight_bytes = sum(int(np.prod(w.shape)) for w in weights) * w_itemsize
    vec_bytes = int(vec.size) * 4
    io_bytes = 2 * tile * (F + O_pad) * 4            # double-buffered in/out tiles
    live_bytes = 4 * tile * W * 4                    # in-flight f32/bf16 hidden activations
    vmem_limit = 2 * (weight_bytes + vec_bytes) + io_bytes + live_bytes + (4 << 20)
    vmem_limit = int(max(16 << 20, min(vmem_limit, (vmem_cap * 3) // 4)))

    flops = 2 * N_pad * (F * H_pad + 3 * H_pad * H_pad + H_pad * O_pad)
    transcendentals = N_pad * (4 * H_pad + O_pad)
    bytes_accessed = (x_p.size + N_pad * O_pad) * 4 + weight_bytes + vec_bytes

    out_p = pl.pallas_call(
        functools.partial(nn1_kernel, h_w=H_pad, o_w=O_pad),
        out_shape=jax.ShapeDtypeStruct((N_pad, O_pad), jnp.float32),
        grid_spec=pltpu.PrefetchScalarGridSpec(
            num_scalar_prefetch=0,
            grid=grid,
            in_specs=in_specs,
            out_specs=out_spec,
        ),
        compiler_params=pltpu.CompilerParams(
            dimension_semantics=("parallel",),
            vmem_limit_bytes=vmem_limit),
        cost_estimate=pl.CostEstimate(
            flops=int(flops),
            transcendentals=int(transcendentals),
            bytes_accessed=int(bytes_accessed)),
    )(*args)

    # Padded rows/cols carry junk (selu(bias) propagated); nothing downstream may read them.
    # If the consumer accepts the padded (N_pad, O_pad) buffer, this slice can be skipped.
    return out_p[:N, :O]


# ---------------------------------------------------------------------------
# Deterministic synthetic parameters (PyTorch-Linear-style uniform init).
# Only the layers feeding the module's return are materialized (h4..h7 are dead).
# ---------------------------------------------------------------------------
def init_params(key, features, hidden, outputs):
    def linear(key, fan_in, fan_out):
        k1, k2 = jax.random.split(key)
        bound = 1.0 / np.sqrt(fan_in)
        w = jax.random.uniform(k1, (fan_in, fan_out), jnp.float32, -bound, bound)
        b = jax.random.uniform(k2, (fan_out,), jnp.float32, -bound, bound)
        return w, b

    def bn(key, c):
        k1, k2, k3, k4 = jax.random.split(key, 4)
        gamma = jax.random.uniform(k1, (c,), jnp.float32, 0.5, 1.5)
        beta = jax.random.uniform(k2, (c,), jnp.float32, -0.2, 0.2)
        mean = jax.random.uniform(k3, (c,), jnp.float32, -0.1, 0.1)
        var = jax.random.uniform(k4, (c,), jnp.float32, 0.5, 1.5)
        return gamma, beta, mean, var

    keys = jax.random.split(key, 12)
    p = {}
    p["bn0"] = bn(keys[0], features)
    p["w_in"], p["b_in"] = linear(keys[1], features, hidden)
    p["bn01"] = bn(keys[2], hidden)
    p["w1"], p["b1"] = linear(keys[3], hidden, hidden)
    p["bn1"] = bn(keys[4], hidden)
    p["w2"], p["b2"] = linear(keys[5], hidden, hidden)
    p["bn2"] = bn(keys[6], hidden)
    p["w3"], p["b3"] = linear(keys[7], hidden, hidden)
    p["bn3"] = bn(keys[8], hidden)
    p["w_out"], p["b_out"] = linear(keys[9], hidden, outputs)
    p["bn_out"] = bn(keys[10], outputs)
    return p


def nn1_reference(x, params):
    """Pure-JAX reference of the same eval-mode forward (unfolded, like the PyTorch module)."""
    def layer(h, w, b, bnp):
        s, t = fold_bn(*bnp)
        return _selu(h @ w + b[None, :]) * s[None, :] + t[None, :]

    s0, t0 = fold_bn(*params["bn0"])
    h = x * s0[None, :] + t0[None, :]
    a = layer(h, params["w_in"], params["b_in"], params["bn01"])
    h1 = layer(a, params["w1"], params["b1"], params["bn1"])
    h2 = layer(h1, params["w2"], params["b2"], params["bn2"])
    h3 = layer(h2, params["w3"], params["b3"], params["bn3"])
    out = layer(h3, params["w_out"], params["b_out"], params["bn_out"])
    return out


if __name__ == "__main__":
    features, hidden, outputs, batch = 32, 32, 2, 8
    key = jax.random.PRNGKey(0)
    kx, kp = jax.random.split(key)
    x = jax.random.normal(kx, (batch, features), jnp.float32)
    params = init_params(kp, features, hidden, outputs)

    ref = jax.block_until_ready(nn1_reference(x, params))

    # Tight check of the fused math (BN/SELU-scale folding, padding, tiling) in f32.
    out_f32 = jax.block_until_ready(nn1_forward(x, params, weight_dtype=jnp.float32))
    assert out_f32.shape == (batch, outputs)
    np.testing.assert_allclose(np.asarray(out_f32), np.asarray(ref), rtol=1e-3, atol=1e-4)

    # Default bf16-MXU path (f32 accumulation); looser tolerance for bf16 operands.
    out = jax.block_until_ready(nn1_forward(x, params))
    assert out.shape == (batch, outputs)
    np.testing.assert_allclose(np.asarray(out), np.asarray(ref), rtol=5e-2, atol=5e-2)

    print("KERNEL_OK")
</pallas_src>

<mosaic_0001>
module attributes {stable_mosaic.version = 11 : i64} {
  func.func @nn1_kernel(%arg0: i32, %arg1: memref<8x32xf32, #tpu.memory_space<vmem>>, %arg2: memref<32x128xf32, #tpu.memory_space<vmem>>, %arg3: memref<128x128xf32, #tpu.memory_space<vmem>>, %arg4: memref<128x128xf32, #tpu.memory_space<vmem>>, %arg5: memref<128x128xf32, #tpu.memory_space<vmem>>, %arg6: memref<128x128xf32, #tpu.memory_space<vmem>>, %arg7: memref<8x128xf32, #tpu.memory_space<vmem>>, %arg8: memref<8x128xf32, #tpu.memory_space<vmem>>) attributes {dimension_semantics = [#tpu.dimension_semantics<parallel>], iteration_bounds = array<i64: 1>, scalar_prefetch = 0 : i64, scratch_operands = 0 : i64, tpu.core_type = #tpu.core_type<tc>, window_params = [{transform_indices = @transform_0, window_bounds = array<i64: 8, 32>}, {pipeline_mode = #tpu.pipeline_mode<synchronous>, transform_indices = @transform_1, window_bounds = array<i64: 32, 128>}, {pipeline_mode = #tpu.pipeline_mode<synchronous>, transform_indices = @transform_2, window_bounds = array<i64: 128, 128>}, {pipeline_mode = #tpu.pipeline_mode<synchronous>, transform_indices = @transform_3, window_bounds = array<i64: 128, 128>}, {pipeline_mode = #tpu.pipeline_mode<synchronous>, transform_indices = @transform_4, window_bounds = array<i64: 128, 128>}, {pipeline_mode = #tpu.pipeline_mode<synchronous>, transform_indices = @transform_5, window_bounds = array<i64: 128, 128>}, {pipeline_mode = #tpu.pipeline_mode<synchronous>, transform_indices = @transform_6, window_bounds = array<i64: 8, 128>}, {transform_indices = @transform_7, window_bounds = array<i64: 8, 128>}]} {
    %c0 = arith.constant 0 : index
    %c0_0 = arith.constant 0 : index
    %0 = vector.load %arg1[%c0, %c0_0] : memref<8x32xf32, #tpu.memory_space<vmem>>, vector<8x32xf32>
    %c0_1 = arith.constant 0 : index
    %c0_2 = arith.constant 0 : index
    %1 = vector.load %arg2[%c0_1, %c0_2] : memref<32x128xf32, #tpu.memory_space<vmem>>, vector<32x128xf32>
    %cst = arith.constant dense<0.000000e+00> : vector<8x128xf32>
    %2 = tpu.matmul %0, %1, %cst {dimension_numbers = #tpu.dot_dimension_numbers<[1], [0], [0], [1], [0, 0, 1, 1], [], []>} : vector<8x32xf32>, vector<32x128xf32>, vector<8x128xf32> -> vector<8x128xf32>
    %c0_3 = arith.constant 0 : index
    %c0_4 = arith.constant 0 : index
    %3 = vector.load %arg7[%c0_3, %c0_4] : memref<8x128xf32, #tpu.memory_space<vmem>>, vector<1x128xf32>
    %4 = vector.broadcast %3 : vector<1x128xf32> to vector<8x128xf32>
    %5 = arith.addf %2, %4 : vector<8x128xf32>
    %cst_5 = arith.constant 0.000000e+00 : f32
    %6 = vector.broadcast %cst_5 : f32 to vector<8x128xf32>
    %7 = arith.cmpf ogt, %5, %6 : vector<8x128xf32>
    %cst_6 = arith.constant 0.000000e+00 : f32
    %8 = vector.broadcast %cst_6 : f32 to vector<8x128xf32>
    %9 = arith.minimumf %5, %8 : vector<8x128xf32>
    %10 = math.exp %9 : vector<8x128xf32>
    %cst_7 = arith.constant 1.000000e+00 : f32
    %11 = vector.broadcast %cst_7 : f32 to vector<8x128xf32>
    %12 = arith.subf %10, %11 : vector<8x128xf32>
    %cst_8 = arith.constant 1.67326319 : f32
    %13 = vector.broadcast %cst_8 : f32 to vector<8x128xf32>
    %14 = arith.mulf %13, %12 : vector<8x128xf32>
    %15 = arith.select %7, %5, %14 : vector<8x128xi1>, vector<8x128xf32>
    %c0_9 = arith.constant 0 : index
    %c0_10 = arith.constant 0 : index
    %16 = vector.load %arg3[%c0_9, %c0_10] : memref<128x128xf32, #tpu.memory_space<vmem>>, vector<128x128xf32>
    %cst_11 = arith.constant dense<0.000000e+00> : vector<8x128xf32>
    %17 = tpu.matmul %15, %16, %cst_11 {dimension_numbers = #tpu.dot_dimension_numbers<[1], [0], [0], [1], [0, 0, 1, 1], [], []>} : vector<8x128xf32>, vector<128x128xf32>, vector<8x128xf32> -> vector<8x128xf32>
    %c1 = arith.constant 1 : index
    %c0_12 = arith.constant 0 : index
    %18 = vector.load %arg7[%c1, %c0_12] : memref<8x128xf32, #tpu.memory_space<vmem>>, vector<1x128xf32>
    %19 = vector.broadcast %18 : vector<1x128xf32> to vector<8x128xf32>
    %20 = arith.addf %17, %19 : vector<8x128xf32>
    %cst_13 = arith.constant 0.000000e+00 : f32
    %21 = vector.broadcast %cst_13 : f32 to vector<8x128xf32>
    %22 = arith.cmpf ogt, %20, %21 : vector<8x128xf32>
    %cst_14 = arith.constant 0.000000e+00 : f32
    %23 = vector.broadcast %cst_14 : f32 to vector<8x128xf32>
    %24 = arith.minimumf %20, %23 : vector<8x128xf32>
    %25 = math.exp %24 : vector<8x128xf32>
    %cst_15 = arith.constant 1.000000e+00 : f32
    %26 = vector.broadcast %cst_15 : f32 to vector<8x128xf32>
    %27 = arith.subf %25, %26 : vector<8x128xf32>
    %cst_16 = arith.constant 1.67326319 : f32
    %28 = vector.broadcast %cst_16 : f32 to vector<8x128xf32>
    %29 = arith.mulf %28, %27 : vector<8x128xf32>
    %30 = arith.select %22, %20, %29 : vector<8x128xi1>, vector<8x128xf32>
    %c0_17 = arith.constant 0 : index
    %c0_18 = arith.constant 0 : index
    %31 = vector.load %arg4[%c0_17, %c0_18] : memref<128x128xf32, #tpu.memory_space<vmem>>, vector<128x128xf32>
    %cst_19 = arith.constant dense<0.000000e+00> : vector<8x128xf32>
    %32 = tpu.matmul %30, %31, %cst_19 {dimension_numbers = #tpu.dot_dimension_numbers<[1], [0], [0], [1], [0, 0, 1, 1], [], []>} : vector<8x128xf32>, vector<128x128xf32>, vector<8x128xf32> -> vector<8x128xf32>
    %c2 = arith.constant 2 : index
    %c0_20 = arith.constant 0 : index
    %33 = vector.load %arg7[%c2, %c0_20] : memref<8x128xf32, #tpu.memory_space<vmem>>, vector<1x128xf32>
    %34 = vector.broadcast %33 : vector<1x128xf32> to vector<8x128xf32>
    %35 = arith.addf %32, %34 : vector<8x128xf32>
    %cst_21 = arith.constant 0.000000e+00 : f32
    %36 = vector.broadcast %cst_21 : f32 to vector<8x128xf32>
    %37 = arith.cmpf ogt, %35, %36 : vector<8x128xf32>
    %cst_22 = arith.constant 0.000000e+00 : f32
    %38 = vector.broadcast %cst_22 : f32 to vector<8x128xf32>
    %39 = arith.minimumf %35, %38 : vector<8x128xf32>
    %40 = math.exp %39 : vector<8x128xf32>
    %cst_23 = arith.constant 1.000000e+00 : f32
    %41 = vector.broadcast %cst_23 : f32 to vector<8x128xf32>
    %42 = arith.subf %40, %41 : vector<8x128xf32>
    %cst_24 = arith.constant 1.67326319 : f32
    %43 = vector.broadcast %cst_24 : f32 to vector<8x128xf32>
    %44 = arith.mulf %43, %42 : vector<8x128xf32>
    %45 = arith.select %37, %35, %44 : vector<8x128xi1>, vector<8x128xf32>
    %c0_25 = arith.constant 0 : index
    %c0_26 = arith.constant 0 : index
    %46 = vector.load %arg5[%c0_25, %c0_26] : memref<128x128xf32, #tpu.memory_space<vmem>>, vector<128x128xf32>
    %cst_27 = arith.constant dense<0.000000e+00> : vector<8x128xf32>
    %47 = tpu.matmul %45, %46, %cst_27 {dimension_numbers = #tpu.dot_dimension_numbers<[1], [0], [0], [1], [0, 0, 1, 1], [], []>} : vector<8x128xf32>, vector<128x128xf32>, vector<8x128xf32> -> vector<8x128xf32>
    %c3 = arith.constant 3 : index
    %c0_28 = arith.constant 0 : index
    %48 = vector.load %arg7[%c3, %c0_28] : memref<8x128xf32, #tpu.memory_space<vmem>>, vector<1x128xf32>
    %49 = vector.broadcast %48 : vector<1x128xf32> to vector<8x128xf32>
    %50 = arith.addf %47, %49 : vector<8x128xf32>
    %cst_29 = arith.constant 0.000000e+00 : f32
    %51 = vector.broadcast %cst_29 : f32 to vector<8x128xf32>
    %52 = arith.cmpf ogt, %50, %51 : vector<8x128xf32>
    %cst_30 = arith.constant 0.000000e+00 : f32
    %53 = vector.broadcast %cst_30 : f32 to vector<8x128xf32>
    %54 = arith.minimumf %50, %53 : vector<8x128xf32>
    %55 = math.exp %54 : vector<8x128xf32>
    %cst_31 = arith.constant 1.000000e+00 : f32
    %56 = vector.broadcast %cst_31 : f32 to vector<8x128xf32>
    %57 = arith.subf %55, %56 : vector<8x128xf32>
    %cst_32 = arith.constant 1.67326319 : f32
    %58 = vector.broadcast %cst_32 : f32 to vector<8x128xf32>
    %59 = arith.mulf %58, %57 : vector<8x128xf32>
    %60 = arith.select %52, %50, %59 : vector<8x128xi1>, vector<8x128xf32>
    %c0_33 = arith.constant 0 : index
    %c0_34 = arith.constant 0 : index
    %61 = vector.load %arg6[%c0_33, %c0_34] : memref<128x128xf32, #tpu.memory_space<vmem>>, vector<128x128xf32>
    %cst_35 = arith.constant dense<0.000000e+00> : vector<8x128xf32>
    %62 = tpu.matmul %60, %61, %cst_35 {dimension_numbers = #tpu.dot_dimension_numbers<[1], [0], [0], [1], [0, 0, 1, 1], [], []>} : vector<8x128xf32>, vector<128x128xf32>, vector<8x128xf32> -> vector<8x128xf32>
    %c4 = arith.constant 4 : index
    %c0_36 = arith.constant 0 : index
    %63 = vector.load %arg7[%c4, %c0_36] : memref<8x128xf32, #tpu.memory_space<vmem>>, vector<1x128xf32>
    %64 = vector.broadcast %63 : vector<1x128xf32> to vector<8x128xf32>
    %65 = arith.addf %62, %64 : vector<8x128xf32>
    %cst_37 = arith.constant 0.000000e+00 : f32
    %66 = vector.broadcast %cst_37 : f32 to vector<8x128xf32>
    %67 = arith.cmpf ogt, %65, %66 : vector<8x128xf32>
    %cst_38 = arith.constant 0.000000e+00 : f32
    %68 = vector.broadcast %cst_38 : f32 to vector<8x128xf32>
    %69 = arith.minimumf %65, %68 : vector<8x128xf32>
    %70 = math.exp %69 : vector<8x128xf32>
    %cst_39 = arith.constant 1.000000e+00 : f32
    %71 = vector.broadcast %cst_39 : f32 to vector<8x128xf32>
    %72 = arith.subf %70, %71 : vector<8x128xf32>
    %cst_40 = arith.constant 1.67326319 : f32
    %73 = vector.broadcast %cst_40 : f32 to vector<8x128xf32>
    %74 = arith.mulf %73, %72 : vector<8x128xf32>
    %75 = arith.select %67, %65, %74 : vector<8x128xi1>, vector<8x128xf32>
    %c5 = arith.constant 5 : index
    %c0_41 = arith.constant 0 : index
    %76 = vector.load %arg7[%c5, %c0_41] : memref<8x128xf32, #tpu.memory_space<vmem>>, vector<1x128xf32>
    %77 = vector.broadcast %76 : vector<1x128xf32> to vector<8x128xf32>
    %78 = arith.mulf %75, %77 : vector<8x128xf32>
    %c6 = arith.constant 6 : index
    %c0_42 = arith.constant 0 : index
    %79 = vector.load %arg7[%c6, %c0_42] : memref<8x128xf32, #tpu.memory_space<vmem>>, vector<1x128xf32>
    %80 = vector.broadcast %79 : vector<1x128xf32> to vector<8x128xf32>
    %81 = arith.addf %78, %80 : vector<8x128xf32>
    %c0_43 = arith.constant 0 : index
    %c0_44 = arith.constant 0 : index
    %82 = vector.load %arg8[%c0_43, %c0_44] : memref<8x128xf32, #tpu.memory_space<vmem>>, vector<8x128xf32>
    tpu.vector_store %arg8[%c0_43, %c0_44], %81 {strides = array<i32>} : memref<8x128xf32, #tpu.memory_space<vmem>>, vector<8x128xf32>,
    return
  }
  func.func @transform_0(%arg0: i32) -> (i32, i32) {
    %c0_i32 = arith.constant 0 : i32
    %c0_i32_0 = arith.constant 0 : i32
    return %arg0, %c0_i32 : i32, i32
  }
  func.func @transform_1(%arg0: i32) -> (i32, i32) {
    %c0_i32 = arith.constant 0 : i32
    %c0_i32_0 = arith.constant 0 : i32
    %c0_i32_1 = arith.constant 0 : i32
    return %c0_i32, %c0_i32_0 : i32, i32
  }
  func.func @transform_2(%arg0: i32) -> (i32, i32) {
    %c0_i32 = arith.constant 0 : i32
    %c0_i32_0 = arith.constant 0 : i32
    %c0_i32_1 = arith.constant 0 : i32
    return %c0_i32, %c0_i32_0 : i32, i32
  }
  func.func @transform_3(%arg0: i32) -> (i32, i32) {
    %c0_i32 = arith.constant 0 : i32
    %c0_i32_0 = arith.constant 0 : i32
    %c0_i32_1 = arith.constant 0 : i32
    return %c0_i32, %c0_i32_0 : i32, i32
  }
  func.func @transform_4(%arg0: i32) -> (i32, i32) {
    %c0_i32 = arith.constant 0 : i32
    %c0_i32_0 = arith.constant 0 : i32
    %c0_i32_1 = arith.constant 0 : i32
    return %c0_i32, %c0_i32_0 : i32, i32
  }
  func.func @transform_5(%arg0: i32) -> (i32, i32) {
    %c0_i32 = arith.constant 0 : i32
    %c0_i32_0 = arith.constant 0 : i32
    %c0_i32_1 = arith.constant 0 : i32
    return %c0_i32, %c0_i32_0 : i32, i32
  }
  func.func @transform_6(%arg0: i32) -> (i32, i32) {
    %c0_i32 = arith.constant 0 : i32
    %c0_i32_0 = arith.constant 0 : i32
    %c0_i32_1 = arith.constant 0 : i32
    return %c0_i32, %c0_i32_0 : i32, i32
  }
  func.func @transform_7(%arg0: i32) -> (i32, i32) {
    %c0_i32 = arith.constant 0 : i32
    %c0_i32_0 = arith.constant 0 : i32
    return %arg0, %c0_i32 : i32, i32
  }
}

</mosaic_0001>

<llo_original>
// kernel: tpu_custom_call.1
$region0: #{tpu_custom_call.1}
  #allocation0 [shape = 'u32[]', space=smem, size = 0x4, offset = 0x4, fixed_abs, tag = 'smem constant byte address 0x4 - core index']
  #allocation1 [shape = 'u32[144,128]{1,0:T(1,128)}', space=vmem, size = 0x12000, scoped, tag = 'internal scratch']
  %s0 = inlined_call_operand.hbm [shape: f32[8,32], index: 0, kind: input, shape index: {}]
  %s1 = inlined_call_operand.hbm [shape: f32[32,128], index: 1, kind: input, shape index: {}]
  %s2 = inlined_call_operand.hbm [shape: f32[128,128], index: 2, kind: input, shape index: {}]
  %s3 = inlined_call_operand.hbm [shape: f32[128,128], index: 3, kind: input, shape index: {}]
  %s4 = inlined_call_operand.hbm [shape: f32[128,128], index: 4, kind: input, shape index: {}]
  %s5 = inlined_call_operand.hbm [shape: f32[128,128], index: 5, kind: input, shape index: {}]
  %s6 = inlined_call_operand.vmem [shape: f32[8,128], index: 6, kind: input, shape index: {}]
  %s7 = inlined_call_operand.hbm [shape: f32[8,128], index: 7, kind: output, shape index: {}]
  %s8 = sld [smem:[#allocation0]]
  $region62: #{tpu_custom_call.1} parent=0
    _
  %s10 = ssub.s32 1, %s8
  %s11 = scalar_select 0, %s10, %s8
  $region1: #{tpu_custom_call.1} parent=0
    #allocation2 [shape = 'u8[4096]{0}', space=vmem, size = 0x1000, scoped, tag = 'input window, operand 0, single buffered']
    #allocation3 [shape = 's32[1]{0}', space=sflag, size = 0x4, scoped, tag = 'scoped memory for tpu_custom_call.1']
    #allocation4 [shape = 's32[1]{0}', space=sflag, size = 0x4, scoped, tag = 'scoped memory for tpu_custom_call.1']
    #allocation5 [shape = 'u8[16384]{0}', space=vmem, size = 0x4000, scoped, tag = 'input window, operand 1, single buffered']
    #allocation6 [shape = 's32[1]{0}', space=sflag, size = 0x4, scoped, tag = 'scoped memory for tpu_custom_call.1']
    #allocation7 [shape = 'u8[65536]{0}', space=vmem, size = 0x10000, scoped, tag = 'input window, operand 2, single buffered']
    #allocation8 [shape = 'u8[65536]{0}', space=vmem, size = 0x10000, scoped, tag = 'input window, operand 3, single buffered']
    #allocation9 [shape = 's32[1]{0}', space=sflag, size = 0x4, scoped, tag = 'scoped memory for tpu_custom_call.1']
    #allocation10 [shape = 'u8[65536]{0}', space=vmem, size = 0x10000, scoped, tag = 'input window, operand 4, single buffered']
    #allocation11 [shape = 'u8[65536]{0}', space=vmem, size = 0x10000, scoped, tag = 'input window, operand 5, single buffered']
    #allocation12 [shape = 's32[1]{0}', space=sflag, size = 0x4, scoped, tag = 'scoped memory for tpu_custom_call.1']
    #allocation13 [shape = 'u8[4096]{0}', space=vmem, size = 0x1000, scoped, tag = 'output window, operand 0, single buffered']
    %12 = vsyncpa [#allocation3], 0
    %13 = vsyncpa [#allocation6], 0
    %14 = vsyncpa [#allocation9], 0
    %15 = vsyncpa [#allocation12], 0
    %16 = vsyncpa [#allocation4], 0
    // Predicated region
    $region2: #{tpu_custom_call.1} parent=1 // pred_check
      _
    $region3: #{tpu_custom_call.1} parent=1 // pred_check_branch
      %18 = sbr.rel (0) target = $region5
    $region4: #{tpu_custom_call.1} parent=1 // pred_region
      %s20 = ssub.s32 128, 128
      %21 = vsyncadd [#allocation3], %s20
      %s23 = sshll.u32 [#allocation2], 4
      %s24 = int_to_ptr.vmem [resolvable:$true] %s23
      %26 = dma.hbm_to_vmem [thread:$0]  %s0, 128, %s24, [#allocation3]
    $region5: #{tpu_custom_call.1} parent=1 // pred_fallthru
      _
    // Predicated region
    $region6: #{tpu_custom_call.1} parent=1 // pred_check
      _
    $region7: #{tpu_custom_call.1} parent=1 // pred_check_branch
      %28 = sbr.rel (0) target = $region9
    $region8: #{tpu_custom_call.1} parent=1 // pred_region
      %s30 = ssub.s32 512, 512
      %31 = vsyncadd [#allocation6], %s30
      %s32 = sshll.u32 [#allocation5], 4
      %s33 = int_to_ptr.vmem [resolvable:$true] %s32
      %38 = dma.hbm_to_vmem [thread:$0]  %s1, 512, %s33, [#allocation6], 128, 128, 8
    $region9: #{tpu_custom_call.1} parent=1 // pred_fallthru
      _
    // Predicated region
    $region10: #{tpu_custom_call.1} parent=1 // pred_check
      _
    $region11: #{tpu_custom_call.1} parent=1 // pred_check_branch
      %40 = sbr.rel (0) target = $region13
    $region12: #{tpu_custom_call.1} parent=1 // pred_region
      %s42 = ssub.s32 2048, 2048
      %43 = vsyncadd [#allocation6], %s42
      %s44 = sshll.u32 [#allocation7], 4
      %s45 = int_to_ptr.vmem [resolvable:$true] %s44
      %50 = dma.hbm_to_vmem [thread:$0]  %s2, 2048, %s45, [#allocation6], 128, 128, 8
    $region13: #{tpu_custom_call.1} parent=1 // pred_fallthru
      _
    // Predicated region
    $region14: #{tpu_custom_call.1} parent=1 // pred_check
      _
    $region15: #{tpu_custom_call.1} parent=1 // pred_check_branch
      %52 = sbr.rel (0) target = $region17
    $region16: #{tpu_custom_call.1} parent=1 // pred_region
      %s54 = ssub.s32 2048, 2048
      %55 = vsyncadd [#allocation9], %s54
      %s56 = sshll.u32 [#allocation8], 4
      %s57 = int_to_ptr.vmem [resolvable:$true] %s56
      %62 = dma.hbm_to_vmem [thread:$0]  %s3, 2048, %s57, [#allocation9], 128, 128, 8
    $region17: #{tpu_custom_call.1} parent=1 // pred_fallthru
      _
    // Predicated region
    $region18: #{tpu_custom_call.1} parent=1 // pred_check
      _
    $region19: #{tpu_custom_call.1} parent=1 // pred_check_branch
      %64 = sbr.rel (0) target = $region21
    $region20: #{tpu_custom_call.1} parent=1 // pred_region
      %s66 = ssub.s32 2048, 2048
      %67 = vsyncadd [#allocation9], %s66
      %s68 = sshll.u32 [#allocation10], 4
      %s69 = int_to_ptr.vmem [resolvable:$true] %s68
      %74 = dma.hbm_to_vmem [thread:$0]  %s4, 2048, %s69, [#allocation9], 128, 128, 8
    $region21: #{tpu_custom_call.1} parent=1 // pred_fallthru
      _
    // Predicated region
    $region22: #{tpu_custom_call.1} parent=1 // pred_check
      _
    $region23: #{tpu_custom_call.1} parent=1 // pred_check_branch
      %76 = sbr.rel (0) target = $region25
    $region24: #{tpu_custom_call.1} parent=1 // pred_region
      %s78 = ssub.s32 2048, 2048
      %79 = vsyncadd [#allocation12], %s78
      %s80 = sshll.u32 [#allocation11], 4
      %s81 = int_to_ptr.vmem [resolvable:$true] %s80
      %86 = dma.hbm_to_vmem [thread:$0]  %s5, 2048, %s81, [#allocation12], 128, 128, 8
    $region25: #{tpu_custom_call.1} parent=1 // pred_fallthru
      _
    // Predicated region
    $region26: #{tpu_custom_call.1} parent=1 // pred_check
      _
    $region27: #{tpu_custom_call.1} parent=1 // pred_check_branch
      %88 = sbr.rel (0) target = $region29
    $region28: #{tpu_custom_call.1} parent=1 // pred_region
      _
    $region29: #{tpu_custom_call.1} parent=1 // pred_fallthru
      _
    // Predicated region
    $region30: #{tpu_custom_call.1} parent=1 // pred_check
      _
    $region31: #{tpu_custom_call.1} parent=1 // pred_check_branch
      %90 = sbr.rel (0) target = $region33
    $region32: #{tpu_custom_call.1} parent=1 // pred_region
      %91 = dma.done [#allocation3], 128
    $region33: #{tpu_custom_call.1} parent=1 // pred_fallthru
      _
    // Predicated region
    $region34: #{tpu_custom_call.1} parent=1 // pred_check
      _
    $region35: #{tpu_custom_call.1} parent=1 // pred_check_branch
      %93 = sbr.rel (0) target = $region37
    $region36: #{tpu_custom_call.1} parent=1 // pred_region
      %94 = dma.done [#allocation6], 512
    $region37: #{tpu_custom_call.1} parent=1 // pred_fallthru
      _
    // Predicated region
    $region38: #{tpu_custom_call.1} parent=1 // pred_check
      _
    $region39: #{tpu_custom_call.1} parent=1 // pred_check_branch
      %96 = sbr.rel (0) target = $region41
    $region40: #{tpu_custom_call.1} parent=1 // pred_region
      %97 = dma.done [#allocation6], 2048
    $region41: #{tpu_custom_call.1} parent=1 // pred_fallthru
      _
    // Predicated region
    $region42: #{tpu_custom_call.1} parent=1 // pred_check
      _
    $region43: #{tpu_custom_call.1} parent=1 // pred_check_branch
      %99 = sbr.rel (0) target = $region45
    $region44: #{tpu_custom_call.1} parent=1 // pred_region
      %100 = dma.done [#allocation9], 2048
    $region45: #{tpu_custom_call.1} parent=1 // pred_fallthru
      _
    // Predicated region
    $region46: #{tpu_custom_call.1} parent=1 // pred_check
      _
    $region47: #{tpu_custom_call.1} parent=1 // pred_check_branch
      %102 = sbr.rel (0) target = $region49
    $region48: #{tpu_custom_call.1} parent=1 // pred_region
      %103 = dma.done [#allocation9], 2048
    $region49: #{tpu_custom_call.1} parent=1 // pred_fallthru
      _
    // Predicated region
    $region50: #{tpu_custom_call.1} parent=1 // pred_check
      _
    $region51: #{tpu_custom_call.1} parent=1 // pred_check_branch
      %105 = sbr.rel (0) target = $region53
    $region52: #{tpu_custom_call.1} parent=1 // pred_region
      %106 = dma.done [#allocation12], 2048
    $region53: #{tpu_custom_call.1} parent=1 // pred_fallthru
      _
    %v107 = vld [vmem:[#allocation2] sm:$0xff]
    %v108 = vld [vmem:[#allocation5] sm:$0xff]
    %v109 = vld [vmem:[#allocation5 + $0x8] sm:$0xff]
    %v110 = vld [vmem:[#allocation5 + $0x10] sm:$0xff]
    %v111 = vld [vmem:[#allocation5 + $0x18] sm:$0xff]
    %v112 = vld [vmem:[%s6] sm:$0x1]
    %v113 = vlaneseq
    %v114 = vshrl.u32 %v113, 7
    %v115 = vsub.s32 0, %v114
    %v116 = vrot.slane %v112, %v115
    %vm117 = vcmask 261120
    %v119 = vsel %vm117, %v107, 0
    %121 = vmatprep.subr.mxu0 0.0
    %122 = vmatpush1.msra.mxu0 0.0
    %123 = vmatprep.subr.mxu0 0.0
    %124 = vmatpush1.msra.mxu0 0.0
    %125 = vmatprep.subr.mxu0 0.0
    %126 = vmatpush1.msra.mxu0 0.0
    %127 = vmatprep.subr.mxu0 0.0
    %128 = vmatpush1.msra.mxu0 0.0
    %129 = vmatprep.subr.mxu0 0.0
    %130 = vmatpush1.msra.mxu0 0.0
    %131 = vmatprep.subr.mxu0 0.0
    %132 = vmatpush1.msra.mxu0 0.0
    %133 = vmatprep.subr.mxu0 0.0
    %134 = vmatpush1.msra.mxu0 0.0
    %135 = vmatprep.subr.mxu0 0.0
    %136 = vmatpush1.msra.mxu0 0.0
    %137 = vmatprep.subr.mxu0 0.0
    %138 = vmatpush1.msra.mxu0 0.0
    %139 = vmatprep.subr.mxu0 0.0
    %140 = vmatpush1.msra.mxu0 0.0
    %141 = vmatprep.subr.mxu0 0.0
    %142 = vmatpush1.msra.mxu0 0.0
    %143 = vmatprep.subr.mxu0 0.0
    %144 = vmatpush1.msra.mxu0 0.0
    %145 = vmatprep.subr.mxu0 0.0
    %146 = vmatpush1.msra.mxu0 %v111
    %147 = vmatprep.subr.mxu0 0.0
    %148 = vmatpush1.msra.mxu0 %v110
    %149 = vmatprep.subr.mxu0 0.0
    %150 = vmatpush1.msra.mxu0 %v109
    %151 = vmatprep.subr.mxu0 0.0
    %152 = vmatpush1.msra.mxu0 %v108
    %153 = vmatprep.subr.mxu0 0.0
    %154 = vmatpush2.msra.mxu0 0.0
    %155 = vmatprep.subr.mxu0 0.0
    %156 = vmatpush2.msra.mxu0 0.0
    %157 = vmatprep.subr.mxu0 0.0
    %158 = vmatpush2.msra.mxu0 0.0
    %159 = vmatprep.subr.mxu0 0.0
    %160 = vmatpush2.msra.mxu0 0.0
    %161 = vmatprep.subr.mxu0 0.0
    %162 = vmatpush2.msra.mxu0 0.0
    %163 = vmatprep.subr.mxu0 0.0
    %164 = vmatpush2.msra.mxu0 0.0
    %165 = vmatprep.subr.mxu0 0.0
    %166 = vmatpush2.msra.mxu0 0.0
    %167 = vmatprep.subr.mxu0 0.0
    %168 = vmatpush2.msra.mxu0 0.0
    %169 = vmatprep.subr.mxu0 0.0
    %170 = vmatpush2.msra.mxu0 0.0
    %171 = vmatprep.subr.mxu0 0.0
    %172 = vmatpush2.msra.mxu0 0.0
    %173 = vmatprep.subr.mxu0 0.0
    %174 = vmatpush2.msra.mxu0 0.0
    %175 = vmatprep.subr.mxu0 0.0
    %176 = vmatpush2.msra.mxu0 0.0
    %177 = vmatprep.subr.mxu0 0.0
    %178 = vmatpush2.msra.mxu0 0.0
    %179 = vmatprep.subr.mxu0 0.0
    %180 = vmatpush2.msra.mxu0 0.0
    %181 = vmatprep.subr.mxu0 0.0
    %182 = vmatpush2.msra.mxu0 0.0
    %183 = vmatprep.subr.mxu0 0.0
    %184 = vmatpush2.msra.mxu0 0.0
    %185 = vmatprep.mubr.f32.mxu0 0.0
    %186 = vmatmul.mubr.f32.gmra.mxu0 %v119
    %v187 = vpop.f32.mrf.mxu0
    %v188 = vadd.f32 %v116, %v187
    %v189 = vpop.f32.mrf.mxu0
    %190 = vdwg.mxu0
    %vm191 = vcmp.gt.f32.partialorder %v188, 0.0
    %v192 = vmin.f32 %v188, 0.0
    %v193 = vmul.f32 %v192, 1.442695
    %v194 = vpow.pop %v193
    %v195 = vsub.f32 %v194, 1.0
    %v196 = vmul.f32 %v195, 1.6732632
    %v197 = vsel %vm191, %v188, %v196
    %v198 = vld [vmem:[#allocation7] sm:$0xff]
    %v199 = vld [vmem:[#allocation7 + $0x8] sm:$0xff]
    %v200 = vld [vmem:[#allocation7 + $0x10] sm:$0xff]
    %v201 = vld [vmem:[#allocation7 + $0x18] sm:$0xff]
    %v202 = vld [vmem:[#allocation7 + $0x20] sm:$0xff]
    %v203 = vld [vmem:[#allocation7 + $0x28] sm:$0xff]
    %v204 = vld [vmem:[#allocation7 + $0x30] sm:$0xff]
    %v205 = vld [vmem:[#allocation7 + $0x38] sm:$0xff]
    %v206 = vld [vmem:[#allocation7 + $0x40] sm:$0xff]
    %v207 = vld [vmem:[#allocation7 + $0x48] sm:$0xff]
    %v208 = vld [vmem:[#allocation7 + $0x50] sm:$0xff]
    %v209 = vld [vmem:[#allocation7 + $0x58] sm:$0xff]
    %v210 = vld [vmem:[#allocation7 + $0x60] sm:$0xff]
    %v211 = vld [vmem:[#allocation7 + $0x68] sm:$0xff]
    %v212 = vld [vmem:[#allocation7 + $0x70] sm:$0xff]
    %v213 = vld [vmem:[#allocation7 + $0x78] sm:$0xff]
    %v214 = vld [vmem:[%s6 + $0x1] sm:$0x1]
    %v215 = vlaneseq
    %v216 = vshrl.u32 %v215, 7
    %v217 = vsub.s32 0, %v216
    %v218 = vrot.slane %v214, %v217
    %219 = vmatprep.subr.mxu0 0.0
    %220 = vmatpush1.msra.mxu0 %v213
    %221 = vmatprep.subr.mxu0 0.0
    %222 = vmatpush1.msra.mxu0 %v212
    %223 = vmatprep.subr.mxu0 0.0
    %224 = vmatpush1.msra.mxu0 %v211
    %225 = vmatprep.subr.mxu0 0.0
    %226 = vmatpush1.msra.mxu0 %v210
    %227 = vmatprep.subr.mxu0 0.0
    %228 = vmatpush1.msra.mxu0 %v209
    %229 = vmatprep.subr.mxu0 0.0
    %230 = vmatpush1.msra.mxu0 %v208
    %231 = vmatprep.subr.mxu0 0.0
    %232 = vmatpush1.msra.mxu0 %v207
    %233 = vmatprep.subr.mxu0 0.0
    %234 = vmatpush1.msra.mxu0 %v206
    %235 = vmatprep.subr.mxu0 0.0
    %236 = vmatpush1.msra.mxu0 %v205
    %237 = vmatprep.subr.mxu0 0.0
    %238 = vmatpush1.msra.mxu0 %v204
    %239 = vmatprep.subr.mxu0 0.0
    %240 = vmatpush1.msra.mxu0 %v203
    %241 = vmatprep.subr.mxu0 0.0
    %242 = vmatpush1.msra.mxu0 %v202
    %243 = vmatprep.subr.mxu0 0.0
    %244 = vmatpush1.msra.mxu0 %v201
    %245 = vmatprep.subr.mxu0 0.0
    %246 = vmatpush1.msra.mxu0 %v200
    %247 = vmatprep.subr.mxu0 0.0
    %248 = vmatpush1.msra.mxu0 %v199
    %249 = vmatprep.subr.mxu0 0.0
    %250 = vmatpush1.msra.mxu0 %v198
    %251 = vmatprep.subr.mxu0 0.0
    %252 = vmatpush2.msra.mxu0 0.0
    %253 = vmatprep.subr.mxu0 0.0
    %254 = vmatpush2.msra.mxu0 0.0
    %255 = vmatprep.subr.mxu0 0.0
    %256 = vmatpush2.msra.mxu0 0.0
    %257 = vmatprep.subr.mxu0 0.0
    %258 = vmatpush2.msra.mxu0 0.0
    %259 = vmatprep.subr.mxu0 0.0
    %260 = vmatpush2.msra.mxu0 0.0
    %261 = vmatprep.subr.mxu0 0.0
    %262 = vmatpush2.msra.mxu0 0.0
    %263 = vmatprep.subr.mxu0 0.0
    %264 = vmatpush2.msra.mxu0 0.0
    %265 = vmatprep.subr.mxu0 0.0
    %266 = vmatpush2.msra.mxu0 0.0
    %267 = vmatprep.subr.mxu0 0.0
    %268 = vmatpush2.msra.mxu0 0.0
    %269 = vmatprep.subr.mxu0 0.0
    %270 = vmatpush2.msra.mxu0 0.0
    %271 = vmatprep.subr.mxu0 0.0
    %272 = vmatpush2.msra.mxu0 0.0
    %273 = vmatprep.subr.mxu0 0.0
    %274 = vmatpush2.msra.mxu0 0.0
    %275 = vmatprep.subr.mxu0 0.0
    %276 = vmatpush2.msra.mxu0 0.0
    %277 = vmatprep.subr.mxu0 0.0
    %278 = vmatpush2.msra.mxu0 0.0
    %279 = vmatprep.subr.mxu0 0.0
    %280 = vmatpush2.msra.mxu0 0.0
    %281 = vmatprep.subr.mxu0 0.0
    %282 = vmatpush2.msra.mxu0 0.0
    %283 = vmatprep.mubr.f32.mxu0 0.0
    %284 = vmatmul.mubr.f32.gmra.mxu0 %v197
    %v285 = vpop.f32.mrf.mxu0
    %v286 = vadd.f32 %v218, %v285
    %v287 = vpop.f32.mrf.mxu0
    %288 = vdwg.mxu0
    %vm289 = vcmp.gt.f32.partialorder %v286, 0.0
    %v290 = vmin.f32 %v286, 0.0
    %v291 = vmul.f32 %v290, 1.442695
    %v292 = vpow.pop %v291
    %v293 = vsub.f32 %v292, 1.0
    %v294 = vmul.f32 %v293, 1.6732632
    %v295 = vsel %vm289, %v286, %v294
    %v296 = vld [vmem:[#allocation8] sm:$0xff]
    %v297 = vld [vmem:[#allocation8 + $0x8] sm:$0xff]
    %v298 = vld [vmem:[#allocation8 + $0x10] sm:$0xff]
    %v299 = vld [vmem:[#allocation8 + $0x18] sm:$0xff]
    %v300 = vld [vmem:[#allocation8 + $0x20] sm:$0xff]
    %v301 = vld [vmem:[#allocation8 + $0x28] sm:$0xff]
    %v302 = vld [vmem:[#allocation8 + $0x30] sm:$0xff]
    %v303 = vld [vmem:[#allocation8 + $0x38] sm:$0xff]
    %v304 = vld [vmem:[#allocation8 + $0x40] sm:$0xff]
    %v305 = vld [vmem:[#allocation8 + $0x48] sm:$0xff]
    %v306 = vld [vmem:[#allocation8 + $0x50] sm:$0xff]
    %v307 = vld [vmem:[#allocation8 + $0x58] sm:$0xff]
    %v308 = vld [vmem:[#allocation8 + $0x60] sm:$0xff]
    %v309 = vld [vmem:[#allocation8 + $0x68] sm:$0xff]
    %v310 = vld [vmem:[#allocation8 + $0x70] sm:$0xff]
    %v311 = vld [vmem:[#allocation8 + $0x78] sm:$0xff]
    %v312 = vld [vmem:[%s6 + $0x2] sm:$0x1]
    %v313 = vlaneseq
    %v314 = vshrl.u32 %v313, 7
    %v315 = vsub.s32 0, %v314
    %v316 = vrot.slane %v312, %v315
    %317 = vmatprep.subr.mxu0 0.0
    %318 = vmatpush1.msra.mxu0 %v311
    %319 = vmatprep.subr.mxu0 0.0
    %320 = vmatpush1.msra.mxu0 %v310
    %321 = vmatprep.subr.mxu0 0.0
    %322 = vmatpush1.msra.mxu0 %v309
    %323 = vmatprep.subr.mxu0 0.0
    %324 = vmatpush1.msra.mxu0 %v308
    %325 = vmatprep.subr.mxu0 0.0
    %326 = vmatpush1.msra.mxu0 %v307
    %327 = vmatprep.subr.mxu0 0.0
    %328 = vmatpush1.msra.mxu0 %v306
    %329 = vmatprep.subr.mxu0 0.0
    %330 = vmatpush1.msra.mxu0 %v305
    %331 = vmatprep.subr.mxu0 0.0
    %332 = vmatpush1.msra.mxu0 %v304
    %333 = vmatprep.subr.mxu0 0.0
    %334 = vmatpush1.msra.mxu0 %v303
    %335 = vmatprep.subr.mxu0 0.0
    %336 = vmatpush1.msra.mxu0 %v302
    %337 = vmatprep.subr.mxu0 0.0
    %338 = vmatpush1.msra.mxu0 %v301
    %339 = vmatprep.subr.mxu0 0.0
    %340 = vmatpush1.msra.mxu0 %v300
    %341 = vmatprep.subr.mxu0 0.0
    %342 = vmatpush1.msra.mxu0 %v299
    %343 = vmatprep.subr.mxu0 0.0
    %344 = vmatpush1.msra.mxu0 %v298
    %345 = vmatprep.subr.mxu0 0.0
    %346 = vmatpush1.msra.mxu0 %v297
    %347 = vmatprep.subr.mxu0 0.0
    %348 = vmatpush1.msra.mxu0 %v296
    %349 = vmatprep.subr.mxu0 0.0
    %350 = vmatpush2.msra.mxu0 0.0
    %351 = vmatprep.subr.mxu0 0.0
    %352 = vmatpush2.msra.mxu0 0.0
    %353 = vmatprep.subr.mxu0 0.0
    %354 = vmatpush2.msra.mxu0 0.0
    %355 = vmatprep.subr.mxu0 0.0
    %356 = vmatpush2.msra.mxu0 0.0
    %357 = vmatprep.subr.mxu0 0.0
    %358 = vmatpush2.msra.mxu0 0.0
    %359 = vmatprep.subr.mxu0 0.0
    %360 = vmatpush2.msra.mxu0 0.0
    %361 = vmatprep.subr.mxu0 0.0
    %362 = vmatpush2.msra.mxu0 0.0
    %363 = vmatprep.subr.mxu0 0.0
    %364 = vmatpush2.msra.mxu0 0.0
    %365 = vmatprep.subr.mxu0 0.0
    %366 = vmatpush2.msra.mxu0 0.0
    %367 = vmatprep.subr.mxu0 0.0
    %368 = vmatpush2.msra.mxu0 0.0
    %369 = vmatprep.subr.mxu0 0.0
    %370 = vmatpush2.msra.mxu0 0.0
    %371 = vmatprep.subr.mxu0 0.0
    %372 = vmatpush2.msra.mxu0 0.0
    %373 = vmatprep.subr.mxu0 0.0
    %374 = vmatpush2.msra.mxu0 0.0
    %375 = vmatprep.subr.mxu0 0.0
    %376 = vmatpush2.msra.mxu0 0.0
    %377 = vmatprep.subr.mxu0 0.0
    %378 = vmatpush2.msra.mxu0 0.0
    %379 = vmatprep.subr.mxu0 0.0
    %380 = vmatpush2.msra.mxu0 0.0
    %381 = vmatprep.mubr.f32.mxu0 0.0
    %382 = vmatmul.mubr.f32.gmra.mxu0 %v295
    %v383 = vpop.f32.mrf.mxu0
    %v384 = vadd.f32 %v316, %v383
    %v385 = vpop.f32.mrf.mxu0
    %386 = vdwg.mxu0
    %vm387 = vcmp.gt.f32.partialorder %v384, 0.0
    %v388 = vmin.f32 %v384, 0.0
    %v389 = vmul.f32 %v388, 1.442695
    %v390 = vpow.pop %v389
    %v391 = vsub.f32 %v390, 1.0
    %v392 = vmul.f32 %v391, 1.6732632
    %v393 = vsel %vm387, %v384, %v392
    %v394 = vld [vmem:[#allocation10] sm:$0xff]
    %v395 = vld [vmem:[#allocation10 + $0x8] sm:$0xff]
    %v396 = vld [vmem:[#allocation10 + $0x10] sm:$0xff]
    %v397 = vld [vmem:[#allocation10 + $0x18] sm:$0xff]
    %v398 = vld [vmem:[#allocation10 + $0x20] sm:$0xff]
    %v399 = vld [vmem:[#allocation10 + $0x28] sm:$0xff]
    %v400 = vld [vmem:[#allocation10 + $0x30] sm:$0xff]
    %v401 = vld [vmem:[#allocation10 + $0x38] sm:$0xff]
    %v402 = vld [vmem:[#allocation10 + $0x40] sm:$0xff]
    %v403 = vld [vmem:[#allocation10 + $0x48] sm:$0xff]
    %v404 = vld [vmem:[#allocation10 + $0x50] sm:$0xff]
    %v405 = vld [vmem:[#allocation10 + $0x58] sm:$0xff]
    %v406 = vld [vmem:[#allocation10 + $0x60] sm:$0xff]
    %v407 = vld [vmem:[#allocation10 + $0x68] sm:$0xff]
    %v408 = vld [vmem:[#allocation10 + $0x70] sm:$0xff]
    %v409 = vld [vmem:[#allocation10 + $0x78] sm:$0xff]
    %v410 = vld [vmem:[%s6 + $0x3] sm:$0x1]
    %v411 = vlaneseq
    %v412 = vshrl.u32 %v411, 7
    %v413 = vsub.s32 0, %v412
    %v414 = vrot.slane %v410, %v413
    %415 = vmatprep.subr.mxu0 0.0
    %416 = vmatpush1.msra.mxu0 %v409
    %417 = vmatprep.subr.mxu0 0.0
    %418 = vmatpush1.msra.mxu0 %v408
    %419 = vmatprep.subr.mxu0 0.0
    %420 = vmatpush1.msra.mxu0 %v407
    %421 = vmatprep.subr.mxu0 0.0
    %422 = vmatpush1.msra.mxu0 %v406
    %423 = vmatprep.subr.mxu0 0.0
    %424 = vmatpush1.msra.mxu0 %v405
    %425 = vmatprep.subr.mxu0 0.0
    %426 = vmatpush1.msra.mxu0 %v404
    %427 = vmatprep.subr.mxu0 0.0
    %428 = vmatpush1.msra.mxu0 %v403
    %429 = vmatprep.subr.mxu0 0.0
    %430 = vmatpush1.msra.mxu0 %v402
    %431 = vmatprep.subr.mxu0 0.0
    %432 = vmatpush1.msra.mxu0 %v401
    %433 = vmatprep.subr.mxu0 0.0
    %434 = vmatpush1.msra.mxu0 %v400
    %435 = vmatprep.subr.mxu0 0.0
    %436 = vmatpush1.msra.mxu0 %v399
    %437 = vmatprep.subr.mxu0 0.0
    %438 = vmatpush1.msra.mxu0 %v398
    %439 = vmatprep.subr.mxu0 0.0
    %440 = vmatpush1.msra.mxu0 %v397
    %441 = vmatprep.subr.mxu0 0.0
    %442 = vmatpush1.msra.mxu0 %v396
    %443 = vmatprep.subr.mxu0 0.0
    %444 = vmatpush1.msra.mxu0 %v395
    %445 = vmatprep.subr.mxu0 0.0
    %446 = vmatpush1.msra.mxu0 %v394
    %447 = vmatprep.subr.mxu0 0.0
    %448 = vmatpush2.msra.mxu0 0.0
    %449 = vmatprep.subr.mxu0 0.0
    %450 = vmatpush2.msra.mxu0 0.0
    %451 = vmatprep.subr.mxu0 0.0
    %452 = vmatpush2.msra.mxu0 0.0
    %453 = vmatprep.subr.mxu0 0.0
    %454 = vmatpush2.msra.mxu0 0.0
    %455 = vmatprep.subr.mxu0 0.0
    %456 = vmatpush2.msra.mxu0 0.0
    %457 = vmatprep.subr.mxu0 0.0
    %458 = vmatpush2.msra.mxu0 0.0
    %459 = vmatprep.subr.mxu0 0.0
    %460 = vmatpush2.msra.mxu0 0.0
    %461 = vmatprep.subr.mxu0 0.0
    %462 = vmatpush2.msra.mxu0 0.0
    %463 = vmatprep.subr.mxu0 0.0
    %464 = vmatpush2.msra.mxu0 0.0
    %465 = vmatprep.subr.mxu0 0.0
    %466 = vmatpush2.msra.mxu0 0.0
    %467 = vmatprep.subr.mxu0 0.0
    %468 = vmatpush2.msra.mxu0 0.0
    %469 = vmatprep.subr.mxu0 0.0
    %470 = vmatpush2.msra.mxu0 0.0
    %471 = vmatprep.subr.mxu0 0.0
    %472 = vmatpush2.msra.mxu0 0.0
    %473 = vmatprep.subr.mxu0 0.0
    %474 = vmatpush2.msra.mxu0 0.0
    %475 = vmatprep.subr.mxu0 0.0
    %476 = vmatpush2.msra.mxu0 0.0
    %477 = vmatprep.subr.mxu0 0.0
    %478 = vmatpush2.msra.mxu0 0.0
    %479 = vmatprep.mubr.f32.mxu0 0.0
    %480 = vmatmul.mubr.f32.gmra.mxu0 %v393
    %v481 = vpop.f32.mrf.mxu0
    %v482 = vadd.f32 %v414, %v481
    %v483 = vpop.f32.mrf.mxu0
    %484 = vdwg.mxu0
    %vm485 = vcmp.gt.f32.partialorder %v482, 0.0
    %v486 = vmin.f32 %v482, 0.0
    %v487 = vmul.f32 %v486, 1.442695
    %v488 = vpow.pop %v487
    %v489 = vsub.f32 %v488, 1.0
    %v490 = vmul.f32 %v489, 1.6732632
    %v491 = vsel %vm485, %v482, %v490
    %v492 = vld [vmem:[#allocation11] sm:$0xff]
    %v493 = vld [vmem:[#allocation11 + $0x8] sm:$0xff]
    %v494 = vld [vmem:[#allocation11 + $0x10] sm:$0xff]
    %v495 = vld [vmem:[#allocation11 + $0x18] sm:$0xff]
    %v496 = vld [vmem:[#allocation11 + $0x20] sm:$0xff]
    %v497 = vld [vmem:[#allocation11 + $0x28] sm:$0xff]
    %v498 = vld [vmem:[#allocation11 + $0x30] sm:$0xff]
    %v499 = vld [vmem:[#allocation11 + $0x38] sm:$0xff]
    %v500 = vld [vmem:[#allocation11 + $0x40] sm:$0xff]
    %v501 = vld [vmem:[#allocation11 + $0x48] sm:$0xff]
    %v502 = vld [vmem:[#allocation11 + $0x50] sm:$0xff]
    %v503 = vld [vmem:[#allocation11 + $0x58] sm:$0xff]
    %v504 = vld [vmem:[#allocation11 + $0x60] sm:$0xff]
    %v505 = vld [vmem:[#allocation11 + $0x68] sm:$0xff]
    %v506 = vld [vmem:[#allocation11 + $0x70] sm:$0xff]
    %v507 = vld [vmem:[#allocation11 + $0x78] sm:$0xff]
    %v508 = vld [vmem:[%s6 + $0x4] sm:$0x1]
    %v509 = vlaneseq
    %v510 = vshrl.u32 %v509, 7
    %v511 = vsub.s32 0, %v510
    %v512 = vrot.slane %v508, %v511
    %513 = vmatprep.subr.mxu0 0.0
    %514 = vmatpush1.msra.mxu0 %v507
    %515 = vmatprep.subr.mxu0 0.0
    %516 = vmatpush1.msra.mxu0 %v506
    %517 = vmatprep.subr.mxu0 0.0
    %518 = vmatpush1.msra.mxu0 %v505
    %519 = vmatprep.subr.mxu0 0.0
    %520 = vmatpush1.msra.mxu0 %v504
    %521 = vmatprep.subr.mxu0 0.0
    %522 = vmatpush1.msra.mxu0 %v503
    %523 = vmatprep.subr.mxu0 0.0
    %524 = vmatpush1.msra.mxu0 %v502
    %525 = vmatprep.subr.mxu0 0.0
    %526 = vmatpush1.msra.mxu0 %v501
    %527 = vmatprep.subr.mxu0 0.0
    %528 = vmatpush1.msra.mxu0 %v500
    %529 = vmatprep.subr.mxu0 0.0
    %530 = vmatpush1.msra.mxu0 %v499
    %531 = vmatprep.subr.mxu0 0.0
    %532 = vmatpush1.msra.mxu0 %v498
    %533 = vmatprep.subr.mxu0 0.0
    %534 = vmatpush1.msra.mxu0 %v497
    %535 = vmatprep.subr.mxu0 0.0
    %536 = vmatpush1.msra.mxu0 %v496
    %537 = vmatprep.subr.mxu0 0.0
    %538 = vmatpush1.msra.mxu0 %v495
    %539 = vmatprep.subr.mxu0 0.0
    %540 = vmatpush1.msra.mxu0 %v494
    %541 = vmatprep.subr.mxu0 0.0
    %542 = vmatpush1.msra.mxu0 %v493
    %543 = vmatprep.subr.mxu0 0.0
    %544 = vmatpush1.msra.mxu0 %v492
    %545 = vmatprep.subr.mxu0 0.0
    %546 = vmatpush2.msra.mxu0 0.0
    %547 = vmatprep.subr.mxu0 0.0
    %548 = vmatpush2.msra.mxu0 0.0
    %549 = vmatprep.subr.mxu0 0.0
    %550 = vmatpush2.msra.mxu0 0.0
    %551 = vmatprep.subr.mxu0 0.0
    %552 = vmatpush2.msra.mxu0 0.0
    %553 = vmatprep.subr.mxu0 0.0
    %554 = vmatpush2.msra.mxu0 0.0
    %555 = vmatprep.subr.mxu0 0.0
    %556 = vmatpush2.msra.mxu0 0.0
    %557 = vmatprep.subr.mxu0 0.0
    %558 = vmatpush2.msra.mxu0 0.0
    %559 = vmatprep.subr.mxu0 0.0
    %560 = vmatpush2.msra.mxu0 0.0
    %561 = vmatprep.subr.mxu0 0.0
    %562 = vmatpush2.msra.mxu0 0.0
    %563 = vmatprep.subr.mxu0 0.0
    %564 = vmatpush2.msra.mxu0 0.0
    %565 = vmatprep.subr.mxu0 0.0
    %566 = vmatpush2.msra.mxu0 0.0
    %567 = vmatprep.subr.mxu0 0.0
    %568 = vmatpush2.msra.mxu0 0.0
    %569 = vmatprep.subr.mxu0 0.0
    %570 = vmatpush2.msra.mxu0 0.0
    %571 = vmatprep.subr.mxu0 0.0
    %572 = vmatpush2.msra.mxu0 0.0
    %573 = vmatprep.subr.mxu0 0.0
    %574 = vmatpush2.msra.mxu0 0.0
    %575 = vmatprep.subr.mxu0 0.0
    %576 = vmatpush2.msra.mxu0 0.0
    %577 = vmatprep.mubr.f32.mxu0 0.0
    %578 = vmatmul.mubr.f32.gmra.mxu0 %v491
    %v579 = vpop.f32.mrf.mxu0
    %v580 = vadd.f32 %v512, %v579
    %v581 = vpop.f32.mrf.mxu0
    %582 = vdwg.mxu0
    %vm583 = vcmp.gt.f32.partialorder %v580, 0.0
    %v584 = vmin.f32 %v580, 0.0
    %v585 = vmul.f32 %v584, 1.442695
    %v586 = vpow.pop %v585
    %v587 = vsub.f32 %v586, 1.0
    %v588 = vmul.f32 %v587, 1.6732632
    %v589 = vsel %vm583, %v580, %v588
    %v590 = vld [vmem:[%s6 + $0x5] sm:$0x1]
    %v591 = vlaneseq
    %v592 = vshrl.u32 %v591, 7
    %v593 = vsub.s32 0, %v592
    %v594 = vrot.slane %v590, %v593
    %v595 = vmul.f32 %v589, %v594
    %v596 = vld [vmem:[%s6 + $0x6] sm:$0x1]
    %v597 = vlaneseq
    %v598 = vshrl.u32 %v597, 7
    %v599 = vsub.s32 0, %v598
    %v600 = vrot.slane %v596, %v599
    %v601 = vadd.f32 %v595, %v600
    %602 = vst [vmem:[#allocation13] sm:$0xff] %v601
    // Predicated region
    $region54: #{tpu_custom_call.1} parent=1 // pred_check
      _
    $region55: #{tpu_custom_call.1} parent=1 // pred_check_branch
      %604 = sbr.rel (0) target = $region57
    $region56: #{tpu_custom_call.1} parent=1 // pred_region
      %s606 = ssub.s32 128, 128
      %607 = vsyncadd [#allocation4], %s606
      %s609 = sshll.u32 [#allocation13], 4
      %s610 = int_to_ptr.vmem [resolvable:$true] %s609
      %612 = dma.vmem_to_hbm [thread:$0]  %s610, 128, %s7, [#allocation4]
    $region57: #{tpu_custom_call.1} parent=1 // pred_fallthru
      _
    // Predicated region
    $region58: #{tpu_custom_call.1} parent=1 // pred_check
      _
    $region59: #{tpu_custom_call.1} parent=1 // pred_check_branch
      %614 = sbr.rel (0) target = $region61
    $region60: #{tpu_custom_call.1} parent=1 // pred_region
      %615 = dma.done [#allocation4], 128
    $region61: #{tpu_custom_call.1} parent=1 // pred_fallthru
      _
    %616 = vsyncpa [#allocation3], 1
    %617 = vsyncpa [#allocation6], 1
    %618 = vsyncpa [#allocation9], 1
    %619 = vsyncpa [#allocation12], 1
    %620 = vsyncpa [#allocation4], 1

</llo_original>
